<compile_context>
chip_gen: v7x
topology: tpu7x:2x2x1
jax: 0.10.0
libtpu: 0.0.40
codegen_flags: <defaults>
</compile_context>

<pallas_src>
import functools

import jax
import jax.numpy as jnp
import numpy as np
from jax.experimental import pallas as pl
from jax.experimental.pallas import tpu as pltpu

EPS = 1e-6  # matches OMA(eps=1e-06)


def _pick_row_tile(n_rows, hw, itemsize, target_tile_bytes=4 * 1024 * 1024):
    """Largest row tile (multiple of 8, <= 512, <= n_rows) fitting the budget."""
    if n_rows <= 8:
        return max(n_rows, 1)           # single block == full row extent
    tr = min(512, (n_rows // 8) * 8)    # multiple of 8, never exceeds n_rows
    while tr > 8 and tr * hw * itemsize > target_tile_bytes:
        tr -= 8
    return tr


def _oma_stats_kernel(x_ref, mu_ref, sig_ref, *, hw):
    """Per-row spatial stats. x_ref: (TR, HW). Outputs mu/sig: (TR, 1)."""
    x = x_ref[...].astype(jnp.float32)                        # (TR, HW)
    mu = jnp.sum(x, axis=1, keepdims=True) * (1.0 / hw)       # (TR, 1)
    diff = x - mu
    # torch.var defaults to unbiased (N-1 divisor); guard HW == 1.
    var = jnp.sum(diff * diff, axis=1, keepdims=True) * (1.0 / max(hw - 1, 1))
    mu_ref[...] = mu
    sig_ref[...] = jnp.sqrt(var + EPS)


def _oma_apply_kernel(x_ref, scale_ref, bias_ref, o_ref):
    """out = x * scale + bias  (scale/bias are per-row (TR,1) f32)."""
    x = x_ref[...].astype(jnp.float32)                        # (TR, HW)
    o_ref[...] = (x * scale_ref[...] + bias_ref[...]).astype(o_ref.dtype)


def oma_forward(x, label, lmda, perm):
    """x: (B, C, H, W), label: (B,), lmda: (B,) Beta(alpha,alpha) samples,
    perm: (B,) int permutation of the batch. Returns (mixed_x, label)."""
    B, C, H, W = x.shape
    R, HW = B * C, H * W
    io_dtype = x.dtype
    itemsize = jnp.dtype(io_dtype).itemsize

    tr = _pick_row_tile(R, HW, itemsize)
    grid = (pl.cdiv(R, tr),)
    x2d = x.reshape(R, HW)

    cparams = pltpu.CompilerParams(
        dimension_semantics=("parallel",),
        vmem_limit_bytes=32 * 1024 * 1024,
    )

    # ---- pass 1: per-row stats -------------------------------------------
    stats_cost = pl.CostEstimate(
        flops=4 * R * HW,
        transcendentals=R,
        bytes_accessed=R * HW * itemsize + 2 * R * 4,
    )
    mu, sig = pl.pallas_call(
        functools.partial(_oma_stats_kernel, hw=HW),
        out_shape=(jax.ShapeDtypeStruct((R, 1), jnp.float32),) * 2,
        grid=grid,
        in_specs=[pl.BlockSpec((tr, HW), lambda i: (i, 0))],
        out_specs=(pl.BlockSpec((tr, 1), lambda i: (i, 0)),) * 2,
        compiler_params=cparams,
        cost_estimate=stats_cost,
    )(x2d)

    # ---- stat mixing on (R,1) scalars: cheap plain JAX in the wrapper -----
    lm = jnp.repeat(lmda.reshape(B, 1).astype(jnp.float32), C, axis=0)  # (R,1)
    row_perm = (perm[:, None] * C + jnp.arange(C)[None, :]).reshape(R)  # (R,)
    mu2 = mu[row_perm]
    sig2 = sig[row_perm]
    mu_mix = mu * lm + mu2 * (1.0 - lm)
    sig_mix = sig * lm + sig2 * (1.0 - lm)
    # out = (x - mu) / sig * sig_mix + mu_mix == x * scale + bias
    scale = sig_mix / sig                                               # (R,1)
    bias = mu_mix - mu * scale                                          # (R,1)

    # ---- pass 2: elementwise apply ----------------------------------------
    apply_cost = pl.CostEstimate(
        flops=2 * R * HW,
        transcendentals=0,
        bytes_accessed=2 * R * HW * itemsize + 2 * R * 4,
    )
    out2d = pl.pallas_call(
        _oma_apply_kernel,
        out_shape=jax.ShapeDtypeStruct((R, HW), io_dtype),
        grid=grid,
        in_specs=[
            pl.BlockSpec((tr, HW), lambda i: (i, 0)),
            pl.BlockSpec((tr, 1), lambda i: (i, 0)),
            pl.BlockSpec((tr, 1), lambda i: (i, 0)),
        ],
        out_specs=pl.BlockSpec((tr, HW), lambda i: (i, 0)),
        compiler_params=cparams,
        cost_estimate=apply_cost,
    )(x2d, scale, bias)

    return out2d.reshape(B, C, H, W), label


if __name__ == "__main__":
    key = jax.random.PRNGKey(0)
    k_x, k_beta, k_perm = jax.random.split(key, 3)

    B, C, H, W = 2, 4, 16, 16
    alpha = 0.1
    x = jax.random.normal(k_x, (B, C, H, W), dtype=jnp.float32)
    label = jnp.array([0, 1], dtype=jnp.int32)
    lmda = jax.random.beta(k_beta, alpha, alpha, (B,)).astype(jnp.float32)
    perm = jax.random.permutation(k_perm, B)

    out, out_label = oma_forward(x, label, lmda, perm)
    out = jax.block_until_ready(out)

    # plain-JAX reference of the same (steady-state) branch
    mu = x.mean(axis=(2, 3), keepdims=True)
    var = x.var(axis=(2, 3), keepdims=True, ddof=1)
    sig = jnp.sqrt(var + EPS)
    xn = (x - mu) / sig
    lm = lmda.reshape(B, 1, 1, 1)
    ref = xn * (sig * lm + sig[perm] * (1.0 - lm)) + (mu * lm + mu[perm] * (1.0 - lm))
    assert np.allclose(np.asarray(out), np.asarray(ref), atol=1e-4, rtol=1e-4)
    assert np.array_equal(np.asarray(out_label), np.asarray(label))

    print("KERNEL_OK")
</pallas_src>

<mosaic_0001>
module attributes {stable_mosaic.version = 11 : i64} {
  func.func @_oma_stats_kernel(%arg0: i32, %arg1: memref<8x256xf32, #tpu.memory_space<vmem>>, %arg2: memref<8x1xf32, #tpu.memory_space<vmem>>, %arg3: memref<8x1xf32, #tpu.memory_space<vmem>>) attributes {dimension_semantics = [#tpu.dimension_semantics<parallel>], iteration_bounds = array<i64: 1>, scalar_prefetch = 0 : i64, scratch_operands = 0 : i64, tpu.core_type = #tpu.core_type<tc>, window_params = [{transform_indices = @transform_0, window_bounds = array<i64: 8, 256>}, {transform_indices = @transform_1, window_bounds = array<i64: 8, 1>}, {transform_indices = @transform_2, window_bounds = array<i64: 8, 1>}]} {
    %c0 = arith.constant 0 : index
    %c0_0 = arith.constant 0 : index
    %0 = vector.load %arg1[%c0, %c0_0] : memref<8x256xf32, #tpu.memory_space<vmem>>, vector<8x256xf32>
    %cst = arith.constant dense<0.000000e+00> : vector<8xf32>
    %1 = vector.multi_reduction <add>, %0, %cst [1] : vector<8x256xf32> to vector<8xf32>
    %2 = vector.shape_cast %1 : vector<8xf32> to vector<8x1xf32>
    %cst_1 = arith.constant 3.906250e-03 : f32
    %3 = vector.broadcast %cst_1 : f32 to vector<8x1xf32>
    %4 = arith.mulf %2, %3 : vector<8x1xf32>
    %5 = vector.broadcast %4 : vector<8x1xf32> to vector<8x256xf32>
    %6 = arith.subf %0, %5 : vector<8x256xf32>
    %7 = arith.mulf %6, %6 : vector<8x256xf32>
    %cst_2 = arith.constant dense<0.000000e+00> : vector<8xf32>
    %8 = vector.multi_reduction <add>, %7, %cst_2 [1] : vector<8x256xf32> to vector<8xf32>
    %9 = vector.shape_cast %8 : vector<8xf32> to vector<8x1xf32>
    %cst_3 = arith.constant 0.00392156886 : f32
    %10 = vector.broadcast %cst_3 : f32 to vector<8x1xf32>
    %11 = arith.mulf %9, %10 : vector<8x1xf32>
    %c0_4 = arith.constant 0 : index
    %c0_5 = arith.constant 0 : index
    %12 = vector.load %arg2[%c0_4, %c0_5] : memref<8x1xf32, #tpu.memory_space<vmem>>, vector<8x1xf32>
    tpu.vector_store %arg2[%c0_4, %c0_5], %4 {strides = array<i32>} : memref<8x1xf32, #tpu.memory_space<vmem>>, vector<8x1xf32>,
    %cst_6 = arith.constant 9.99999997E-7 : f32
    %13 = vector.broadcast %cst_6 : f32 to vector<8x1xf32>
    %14 = arith.addf %11, %13 : vector<8x1xf32>
    %15 = math.sqrt %14 : vector<8x1xf32>
    %c0_7 = arith.constant 0 : index
    %c0_8 = arith.constant 0 : index
    %16 = vector.load %arg3[%c0_7, %c0_8] : memref<8x1xf32, #tpu.memory_space<vmem>>, vector<8x1xf32>
    tpu.vector_store %arg3[%c0_7, %c0_8], %15 {strides = array<i32>} : memref<8x1xf32, #tpu.memory_space<vmem>>, vector<8x1xf32>,
    return
  }
  func.func @transform_0(%arg0: i32) -> (i32, i32) {
    %c0_i32 = arith.constant 0 : i32
    %c0_i32_0 = arith.constant 0 : i32
    return %arg0, %c0_i32 : i32, i32
  }
  func.func @transform_1(%arg0: i32) -> (i32, i32) {
    %c0_i32 = arith.constant 0 : i32
    %c0_i32_0 = arith.constant 0 : i32
    return %arg0, %c0_i32 : i32, i32
  }
  func.func @transform_2(%arg0: i32) -> (i32, i32) {
    %c0_i32 = arith.constant 0 : i32
    %c0_i32_0 = arith.constant 0 : i32
    return %arg0, %c0_i32 : i32, i32
  }
}

</mosaic_0001>

<llo_original>
// kernel: tpu_custom_call.1
$region0: #{tpu_custom_call.1}
  #allocation0 [shape = 'u32[]', space=smem, size = 0x4, offset = 0x4, fixed_abs, tag = 'smem constant byte address 0x4 - core index']
  #allocation1 [shape = 'u32[144,128]{1,0:T(1,128)}', space=vmem, size = 0x12000, scoped, tag = 'internal scratch']
  %s0 = inlined_call_operand.hbm [shape: f32[8,256], index: 0, kind: input, shape index: {}]
  %s1 = inlined_call_operand.vmem [shape: f32[8,1], index: 1, kind: output, shape index: {0}]
  %s2 = inlined_call_operand.vmem [shape: f32[8,1], index: 2, kind: output, shape index: {1}]
  %3 = xla_tuple %s1, %s2
  %s4 = sld [smem:[#allocation0]]
  $region26: #{tpu_custom_call.1} parent=0
    _
  %s6 = ssub.s32 1, %s4
  %s7 = scalar_select 0, %s6, %s4
  $region1: #{tpu_custom_call.1} parent=0
    #allocation2 [shape = 'u8[8192]{0}', space=vmem, size = 0x2000, scoped, tag = 'input window, operand 0, single buffered']
    #allocation3 [shape = 's32[1]{0}', space=sflag, size = 0x4, scoped, tag = 'scoped memory for tpu_custom_call.1']
    %8 = vsyncpa [#allocation3], 0
    // Predicated region
    $region2: #{tpu_custom_call.1} parent=1 // pred_check
      _
    $region3: #{tpu_custom_call.1} parent=1 // pred_check_branch
      %10 = sbr.rel (0) target = $region5
    $region4: #{tpu_custom_call.1} parent=1 // pred_region
      %s12 = ssub.s32 256, 256
      %13 = vsyncadd [#allocation3], %s12
      %s15 = sshll.u32 [#allocation2], 4
      %s16 = int_to_ptr.vmem [resolvable:$true] %s15
      %18 = dma.hbm_to_vmem [thread:$0]  %s0, 256, %s16, [#allocation3]
    $region5: #{tpu_custom_call.1} parent=1 // pred_fallthru
      _
    // Predicated region
    $region6: #{tpu_custom_call.1} parent=1 // pred_check
      _
    $region7: #{tpu_custom_call.1} parent=1 // pred_check_branch
      %20 = sbr.rel (0) target = $region9
    $region8: #{tpu_custom_call.1} parent=1 // pred_region
      %21 = dma.done [#allocation3], 256
    $region9: #{tpu_custom_call.1} parent=1 // pred_fallthru
      _
    %v22 = vld [vmem:[#allocation2] sm:$0xff]
    %v23 = vld [vmem:[#allocation2 + $0x8] sm:$0xff]
    %v24 = vadd.f32 %v22, %v23
    %25 = vadd.xlane.f32.xlu0 %v24
    %v26 = vpop.xlane.xlu0 %25
    %v27 = vmul.f32 %v26, 0.00390625
    %v28 = vsub.f32 %v22, %v27
    %v29 = vsub.f32 %v23, %v27
    %v30 = vmul.f32 %v28, %v28
    %v31 = vmul.f32 %v29, %v29
    %v32 = vadd.f32 %v30, %v31
    %33 = vadd.xlane.f32.xlu0 %v32
    %v34 = vpop.xlane.xlu0 %33
    %v35 = vmul.f32 %v34, 0.003921569
    %vm36 = vcmask 7168
    %37 = vst.msk [vmem:[%s1] sm:$0xff] %vm36, %v27
    %v38 = vadd.f32 %v35, 1e-06
    %v39 = vrsqrt.pop %v38
    %v40 = vmul.f32 %v38, %v39
    %vm41 = vcmp.eq.f32.partialorder %v38, inf
    %v42 = vsel %vm41, %v38, %v40
    %vm43 = vcmp.eq.f32.partialorder %v38, 0.0
    %v44 = vand.u32 %v38, 2147483648
    %v45 = vsel %vm43, %v44, %v42
    %46 = vst.msk [vmem:[%s2] sm:$0xff] %vm36, %v45
    // Predicated region
    $region10: #{tpu_custom_call.1} parent=1 // pred_check
      _
    $region11: #{tpu_custom_call.1} parent=1 // pred_check_branch
      %48 = sbr.rel (0) target = $region13
    $region12: #{tpu_custom_call.1} parent=1 // pred_region
      _
    $region13: #{tpu_custom_call.1} parent=1 // pred_fallthru
      _
    // Predicated region
    $region14: #{tpu_custom_call.1} parent=1 // pred_check
      _
    $region15: #{tpu_custom_call.1} parent=1 // pred_check_branch
      %50 = sbr.rel (0) target = $region17
    $region16: #{tpu_custom_call.1} parent=1 // pred_region
      _
    $region17: #{tpu_custom_call.1} parent=1 // pred_fallthru
      _
    // Predicated region
    $region18: #{tpu_custom_call.1} parent=1 // pred_check
      _
    $region19: #{tpu_custom_call.1} parent=1 // pred_check_branch
      %52 = sbr.rel (0) target = $region21
    $region20: #{tpu_custom_call.1} parent=1 // pred_region
      _
    $region21: #{tpu_custom_call.1} parent=1 // pred_fallthru
      _
    // Predicated region
    $region22: #{tpu_custom_call.1} parent=1 // pred_check
      _
    $region23: #{tpu_custom_call.1} parent=1 // pred_check_branch
      %54 = sbr.rel (0) target = $region25
    $region24: #{tpu_custom_call.1} parent=1 // pred_region
      _
    $region25: #{tpu_custom_call.1} parent=1 // pred_fallthru
      _
    %55 = vsyncpa [#allocation3], 1

</llo_original>
